<compile_context>
chip_gen: v7x
topology: tpu7x:2x2x1
jax: 0.10.0
libtpu: 0.0.40
codegen_flags: <defaults>
</compile_context>

<pallas_src>
import functools

import jax
import jax.numpy as jnp
from jax.experimental import pallas as pl
from jax.experimental.pallas import tpu as pltpu


def _round_up(x, m):
    return (x + m - 1) // m * m


def _cdiv(a, b):
    return (a + b - 1) // b


# ---------------------------------------------------------------------------
# One-time parameter preparation (hoisted out of the forward path).
# ---------------------------------------------------------------------------
def prepare_gaussian_params(w_mu, b_mu, w_var, b_var, *,
                            raw_sigma_bias=0.25, weight_dtype=None):
    """Fuse the mu/var projections once.  Call at parameter-setup time.

    w_mu, w_var : [input_dim, z_dim] (transpose of the PyTorch Linear weight)
    b_mu, b_var : [z_dim]
    Returns (w_fused [input_dim, z2_pad], b_fused [1, z2_pad] float32, z_dim).
    raw_sigma_bias is folded into the var bias here.
    """
    z_dim = w_mu.shape[1]
    z2 = 2 * z_dim
    z2_pad = _round_up(z2, 128)                   # lane-dense packed width
    w = jnp.concatenate([w_mu, w_var], axis=1)                   # [K, 2*z]
    b = jnp.concatenate([b_mu, b_var + raw_sigma_bias], axis=0)  # [2*z]
    if z2_pad != z2:
        w = jnp.pad(w, ((0, 0), (0, z2_pad - z2)))
        b = jnp.pad(b, ((0, z2_pad - z2),))
    if weight_dtype is not None:
        w = w.astype(weight_dtype)
    b = b.reshape(1, z2_pad).astype(jnp.float32)
    return w, b, z_dim


# ---------------------------------------------------------------------------
# Kernels
# ---------------------------------------------------------------------------
def _epilogue(acc, bias, out_refs, *, z_dim, sigma_min, split):
    acc = acc + bias                       # bias already includes raw_sigma_bias
    if split:
        # z_dim is a multiple of 128: write mu / var as two lane-dense tiles,
        # softplus only touches the var half.
        mu_ref, var_ref = out_refs
        mu_ref[...] = acc[:, :z_dim].astype(mu_ref.dtype)
        var_ref[...] = jnp.maximum(jax.nn.softplus(acc[:, z_dim:]),
                                   sigma_min).astype(var_ref.dtype)
    else:
        (out_ref,) = out_refs
        lane = jax.lax.broadcasted_iota(jnp.int32, (1, acc.shape[1]), 1)
        var = jnp.maximum(jax.nn.softplus(acc), sigma_min)
        # mu lanes pass through; var (and padding) lanes get softplus+clamp.
        out_ref[...] = jnp.where(lane < z_dim, acc, var).astype(out_ref.dtype)


def _gaussian_kernel(x_ref, w_ref, b_ref, *out_refs, z_dim, sigma_min, split):
    # Single K step: one fused MXU matmul, epilogue straight to the output.
    acc = jnp.dot(x_ref[...], w_ref[...], preferred_element_type=jnp.float32)
    _epilogue(acc, b_ref[...], out_refs,
              z_dim=z_dim, sigma_min=sigma_min, split=split)


def _gaussian_kernel_ktiled(x_ref, w_ref, b_ref, *rest, z_dim, sigma_min,
                            split, tile_k, w_resident):
    # grid = (batch tiles [parallel], K tiles [arbitrary / reduction])
    *out_refs, acc_ref = rest
    k = pl.program_id(1)

    @pl.when(k == 0)
    def _():
        acc_ref[...] = jnp.zeros_like(acc_ref)

    if w_resident:
        # Fused weight is fully VMEM-resident (fetched from HBM once); slice
        # the current K chunk in-kernel.
        off = pl.multiple_of(k * tile_k, tile_k)
        w_tile = w_ref[pl.ds(off, tile_k), :]
    else:
        w_tile = w_ref[...]
    acc_ref[...] += jnp.dot(x_ref[...], w_tile,
                            preferred_element_type=jnp.float32)

    @pl.when(k == pl.num_programs(1) - 1)
    def _():
        _epilogue(acc_ref[...], b_ref[...], out_refs,
                  z_dim=z_dim, sigma_min=sigma_min, split=split)


# ---------------------------------------------------------------------------
# Forward wrapper
# ---------------------------------------------------------------------------
def gaussian_forward(x, w_fused, b_fused, z_dim, *, sigma_min=0.0,
                     return_packed=False, interpret=False):
    """x: [B, input_dim]; (w_fused, b_fused, z_dim) from prepare_gaussian_params.

    Returns (z_mu, z_var), each [B, z_dim] in x.dtype.  If return_packed=True,
    returns the packed [B_pad, z2_pad] buffer (lanes [0,z)=mu, [z,2z)=var) so a
    downstream consumer can fuse the lane split.
    """
    B, K = x.shape
    assert w_fused.shape[0] == K, "w_fused must be [input_dim, 2*z_dim (padded)]"
    z2_pad = w_fused.shape[1]
    z2 = 2 * z_dim
    out_dtype = x.dtype
    # Lane-aligned z_dim -> two lane-dense outputs, no post-kernel slicing.
    split = (z_dim % 128 == 0) and not return_packed

    x_isz = jnp.dtype(x.dtype).itemsize
    w_isz = jnp.dtype(w_fused.dtype).itemsize
    out_isz = jnp.dtype(out_dtype).itemsize
    sub = {4: 8, 2: 16, 1: 32}.get(x_isz, 8)      # packed sublane multiple

    # ---- VMEM budget (v7x has 64 MiB/TC; v5e/v6e have 128 MiB). ----
    try:
        vmem_cap = int(pltpu.get_tpu_info().vmem_capacity_bytes)
    except Exception:
        vmem_cap = 64 << 20                        # most-constrained fallback
    budget = min(int(vmem_cap * 0.6), 96 << 20)

    # ---- Batch tiling: >=2 "parallel" tiles so both v7x TCs get work, and
    #      tile size derived from B so zero-pad waste stays under one tile. ----
    n_b = max(1, _cdiv(B, 512))
    if B >= 2 * sub:
        n_b = max(n_b, 2)
    tile_b = _round_up(_cdiv(B, n_b), sub)

    def est_vmem(tb, x_kblk, w_kblk, k_tiled):
        v = (2 * tb * x_kblk * x_isz             # x tiles (double-buffered)
             + 2 * w_kblk * z2_pad * w_isz       # fused weight buffers
             + 2 * z2_pad * 4                    # fused bias
             + 2 * tb * z2_pad * out_isz)        # output tile(s)
        if k_tiled:
            v += tb * z2_pad * 4                 # f32 accumulator scratch
        return v

    # ---- Prefer a single K step (no accumulator, no K grid axis). ----
    k_tiled = K > 2048
    if not k_tiled:
        while est_vmem(tile_b, K, K, False) > budget and tile_b > sub:
            tile_b = _round_up(_cdiv(tile_b, 2), sub)
        k_tiled = est_vmem(tile_b, K, K, False) > budget and K > 256

    if k_tiled:
        tile_k = min(512, _round_up(K, 128))
        K_pad = _round_up(K, tile_k)
        # Keep the whole fused weight VMEM-resident when it fits: DMA'd from
        # HBM once for the whole grid instead of once per batch tile.
        w_resident = est_vmem(tile_b, tile_k, K_pad, True) <= budget
        w_kblk = K_pad if w_resident else tile_k
        while est_vmem(tile_b, tile_k, w_kblk, True) > budget and tile_b > sub:
            tile_b = _round_up(_cdiv(tile_b, 2), sub)
    else:
        tile_k, K_pad, w_resident = K, K, True

    B_pad = _round_up(B, tile_b)
    n_b = B_pad // tile_b

    # Pad only when needed (common path: no extra HBM pass at all).
    if B_pad != B or K_pad != K:
        x = jnp.pad(x, ((0, B_pad - B), (0, K_pad - K)))
    if K_pad != K:
        # Rare: K-tiled and input_dim not a multiple of tile_k.
        w_fused = jnp.pad(w_fused, ((0, K_pad - K), (0, 0)))

    if split:
        out_shape = (jax.ShapeDtypeStruct((B_pad, z_dim), out_dtype),
                     jax.ShapeDtypeStruct((B_pad, z_dim), out_dtype))
    else:
        out_shape = jax.ShapeDtypeStruct((B_pad, z2_pad), out_dtype)

    est = est_vmem(tile_b, tile_k, K_pad if w_resident else tile_k, k_tiled)
    vmem_limit = int(min(max(2 * est, 32 << 20), max(budget, 32 << 20)))

    if not k_tiled:
        kernel = functools.partial(_gaussian_kernel, z_dim=z_dim,
                                   sigma_min=sigma_min, split=split)
        grid = (n_b,)
        in_specs = [pl.BlockSpec((tile_b, K_pad), lambda i: (i, 0)),   # x
                    pl.BlockSpec((K_pad, z2_pad), lambda i: (0, 0)),   # fused W
                    pl.BlockSpec((1, z2_pad), lambda i: (0, 0))]       # fused b
        if split:
            out_specs = [pl.BlockSpec((tile_b, z_dim), lambda i: (i, 0)),
                         pl.BlockSpec((tile_b, z_dim), lambda i: (i, 0))]
        else:
            out_specs = pl.BlockSpec((tile_b, z2_pad), lambda i: (i, 0))
        scratch_shapes = []
        dim_sem = ("parallel",)
    else:
        kernel = functools.partial(_gaussian_kernel_ktiled, z_dim=z_dim,
                                   sigma_min=sigma_min, split=split,
                                   tile_k=tile_k, w_resident=w_resident)
        grid = (n_b, K_pad // tile_k)
        if w_resident:
            w_spec = pl.BlockSpec((K_pad, z2_pad), lambda i, k: (0, 0))
        else:
            w_spec = pl.BlockSpec((tile_k, z2_pad), lambda i, k: (k, 0))
        in_specs = [pl.BlockSpec((tile_b, tile_k), lambda i, k: (i, k)),  # x
                    w_spec,                                               # W
                    pl.BlockSpec((1, z2_pad), lambda i, k: (0, 0))]       # b
        if split:
            out_specs = [pl.BlockSpec((tile_b, z_dim), lambda i, k: (i, 0)),
                         pl.BlockSpec((tile_b, z_dim), lambda i, k: (i, 0))]
        else:
            out_specs = pl.BlockSpec((tile_b, z2_pad), lambda i, k: (i, 0))
        scratch_shapes = [pltpu.VMEM((tile_b, z2_pad), jnp.float32)]
        dim_sem = ("parallel", "arbitrary")

    out = pl.pallas_call(
        kernel,
        out_shape=out_shape,
        grid_spec=pltpu.PrefetchScalarGridSpec(
            num_scalar_prefetch=0,
            grid=grid,
            in_specs=in_specs,
            out_specs=out_specs,
            scratch_shapes=scratch_shapes),
        compiler_params=pltpu.CompilerParams(
            dimension_semantics=dim_sem,
            vmem_limit_bytes=vmem_limit),
        interpret=interpret,
    )(x, w_fused, b_fused)

    if split:
        z_mu, z_var = out
        return z_mu[:B], z_var[:B]
    if return_packed:
        return out
    return out[:B, :z_dim], out[:B, z_dim:z2]


def gaussian_forward_from_linear(x, w_mu, b_mu, w_var, b_var, *,
                                 raw_sigma_bias=0.25, sigma_min=0.0,
                                 weight_dtype=None):
    """Convenience path.  For repeated calls, prepare params once instead."""
    w, b, z_dim = prepare_gaussian_params(w_mu, b_mu, w_var, b_var,
                                          raw_sigma_bias=raw_sigma_bias,
                                          weight_dtype=weight_dtype)
    return gaussian_forward(x, w, b, z_dim, sigma_min=sigma_min)


# TODO(synk): reparameterize() (Gaussian sampling) is not part of forward();
# it could be added with pltpu.prng_seed / stateful_normal if needed.

if __name__ == "__main__":
    key = jax.random.PRNGKey(0)
    HI = jax.lax.Precision.HIGHEST

    def make_params(k, input_dim, z_dim):
        kwm, kbm, kwv, kbv = jax.random.split(k, 4)
        w_mu = jax.random.normal(kwm, (input_dim, z_dim), jnp.float32) * 0.1
        b_mu = jax.random.normal(kbm, (z_dim,), jnp.float32) * 0.1
        w_var = jax.random.normal(kwv, (input_dim, z_dim), jnp.float32) * 0.1
        b_var = jax.random.normal(kbv, (z_dim,), jnp.float32) * 0.1
        return w_mu, b_mu, w_var, b_var

    def ref(x, w_mu, b_mu, w_var, b_var, raw_sigma_bias, sigma_min):
        xf = x.astype(jnp.float32)
        mu = jnp.dot(xf, w_mu, precision=HI) + b_mu
        var = jnp.maximum(
            jax.nn.softplus(jnp.dot(xf, w_var, precision=HI)
                            + b_var + raw_sigma_bias), sigma_min)
        return mu, var

    raw_sigma_bias = 0.25

    # ---- Case 1: module-sized shapes (packed output, single K step). ----
    B, input_dim, z_dim = 16, 32, 16
    k1, k2, key = jax.random.split(key, 3)
    x1 = jax.random.normal(k1, (B, input_dim), dtype=jnp.float32)
    p1 = make_params(k2, input_dim, z_dim)
    w, b, zd = prepare_gaussian_params(*p1, raw_sigma_bias=raw_sigma_bias)
    z_mu, z_var = gaussian_forward(x1, w, b, zd, sigma_min=0.0)
    jax.block_until_ready((z_mu, z_var))
    r_mu, r_var = ref(x1, *p1, raw_sigma_bias, 0.0)
    assert z_mu.shape == (B, z_dim) and z_var.shape == (B, z_dim)
    assert jnp.allclose(z_mu, r_mu, atol=1e-5, rtol=1e-5)
    assert jnp.allclose(z_var, r_var, atol=1e-5, rtol=1e-5)
    assert bool(jnp.all(z_var >= 0.0))

    # ---- Case 2: lane-aligned z_dim -> split (mu, var) outputs, padded B. ----
    B, input_dim, z_dim = 24, 64, 128
    k1, k2, key = jax.random.split(key, 3)
    x2 = jax.random.normal(k1, (B, input_dim), dtype=jnp.float32)
    p2 = make_params(k2, input_dim, z_dim)
    w, b, zd = prepare_gaussian_params(*p2, raw_sigma_bias=raw_sigma_bias)
    z_mu, z_var = gaussian_forward(x2, w, b, zd, sigma_min=0.0)
    jax.block_until_ready((z_mu, z_var))
    r_mu, r_var = ref(x2, *p2, raw_sigma_bias, 0.0)
    assert z_mu.shape == (B, z_dim) and z_var.shape == (B, z_dim)
    assert jnp.allclose(z_mu, r_mu, atol=1e-5, rtol=1e-5)
    assert jnp.allclose(z_var, r_var, atol=1e-5, rtol=1e-5)

    # ---- Case 3: large input_dim -> K-tiled grid, VMEM-resident weight. ----
    B, input_dim, z_dim = 32, 2560, 16
    sigma_min = 0.1
    k1, k2, key = jax.random.split(key, 3)
    x3 = jax.random.normal(k1, (B, input_dim), dtype=jnp.float32)
    p3 = make_params(k2, input_dim, z_dim)
    w, b, zd = prepare_gaussian_params(*p3, raw_sigma_bias=raw_sigma_bias)
    z_mu, z_var = gaussian_forward(x3, w, b, zd, sigma_min=sigma_min)
    jax.block_until_ready((z_mu, z_var))
    r_mu, r_var = ref(x3, *p3, raw_sigma_bias, sigma_min)
    assert jnp.allclose(z_mu, r_mu, atol=2e-4, rtol=2e-4)
    assert jnp.allclose(z_var, r_var, atol=2e-4, rtol=2e-4)
    assert bool(jnp.all(z_var >= sigma_min))

    # ---- Case 4: bf16 activations produced upstream + bf16 weights. ----
    x_bf = x1.astype(jnp.bfloat16)
    w, b, zd = prepare_gaussian_params(*p1, raw_sigma_bias=raw_sigma_bias,
                                       weight_dtype=jnp.bfloat16)
    z_mu_bf, z_var_bf = gaussian_forward(x_bf, w, b, zd, sigma_min=0.0)
    jax.block_until_ready((z_mu_bf, z_var_bf))
    r_mu, r_var = ref(x1, *p1, raw_sigma_bias, 0.0)
    assert jnp.allclose(z_mu_bf.astype(jnp.float32), r_mu, atol=5e-2, rtol=5e-2)
    assert jnp.allclose(z_var_bf.astype(jnp.float32), r_var, atol=5e-2, rtol=5e-2)

    print("KERNEL_OK")
</pallas_src>

<mosaic_0001>
module attributes {stable_mosaic.version = 11 : i64} {
  func.func @_gaussian_kernel(%arg0: i32, %arg1: memref<8x32xf32, #tpu.memory_space<vmem>>, %arg2: memref<32x128xf32, #tpu.memory_space<vmem>>, %arg3: memref<1x128xf32, #tpu.memory_space<vmem>>, %arg4: memref<8x128xf32, #tpu.memory_space<vmem>>) attributes {dimension_semantics = [#tpu.dimension_semantics<parallel>], iteration_bounds = array<i64: 2>, scalar_prefetch = 0 : i64, scratch_operands = 0 : i64, tpu.core_type = #tpu.core_type<tc>, window_params = [{transform_indices = @transform_0, window_bounds = array<i64: 8, 32>}, {pipeline_mode = #tpu.pipeline_mode<synchronous>, transform_indices = @transform_1, window_bounds = array<i64: 32, 128>}, {pipeline_mode = #tpu.pipeline_mode<synchronous>, transform_indices = @transform_2, window_bounds = array<i64: 1, 128>}, {transform_indices = @transform_3, window_bounds = array<i64: 8, 128>}]} {
    %c0 = arith.constant 0 : index
    %c0_0 = arith.constant 0 : index
    %0 = vector.load %arg1[%c0, %c0_0] : memref<8x32xf32, #tpu.memory_space<vmem>>, vector<8x32xf32>
    %c0_1 = arith.constant 0 : index
    %c0_2 = arith.constant 0 : index
    %1 = vector.load %arg2[%c0_1, %c0_2] : memref<32x128xf32, #tpu.memory_space<vmem>>, vector<32x128xf32>
    %cst = arith.constant dense<0.000000e+00> : vector<8x128xf32>
    %2 = tpu.matmul %0, %1, %cst {dimension_numbers = #tpu.dot_dimension_numbers<[1], [0], [0], [1], [0, 0, 1, 1], [], []>} : vector<8x32xf32>, vector<32x128xf32>, vector<8x128xf32> -> vector<8x128xf32>
    %c0_3 = arith.constant 0 : index
    %c0_4 = arith.constant 0 : index
    %3 = vector.load %arg3[%c0_3, %c0_4] : memref<1x128xf32, #tpu.memory_space<vmem>>, vector<1x128xf32>
    %4 = vector.broadcast %3 : vector<1x128xf32> to vector<8x128xf32>
    %5 = arith.addf %2, %4 : vector<8x128xf32>
    %6 = tpu.iota {dimensions = array<i32: 1>} : vector<1x128xi32>
    %cst_5 = arith.constant 0.000000e+00 : f32
    %7 = vector.broadcast %cst_5 : f32 to vector<8x128xf32>
    %8 = arith.maximumf %5, %7 : vector<8x128xf32>
    %9 = vector.broadcast %cst_5 : f32 to vector<8x128xf32>
    %10 = arith.subf %5, %9 : vector<8x128xf32>
    %11 = arith.cmpf one, %10, %10 : vector<8x128xf32>
    %12 = vector.broadcast %cst_5 : f32 to vector<8x128xf32>
    %13 = arith.addf %5, %12 : vector<8x128xf32>
    %14 = math.absf %10 : vector<8x128xf32>
    %cst_6 = arith.constant 0.000000e+00 : f32
    %15 = vector.broadcast %cst_6 : f32 to vector<8x128xf32>
    %16 = arith.subf %15, %14 : vector<8x128xf32>
    %17 = math.exp %16 : vector<8x128xf32>
    %18 = math.log1p %17 : vector<8x128xf32>
    %19 = arith.addf %8, %18 : vector<8x128xf32>
    %20 = arith.select %11, %13, %19 : vector<8x128xi1>, vector<8x128xf32>
    %cst_7 = arith.constant 0.000000e+00 : f32
    %21 = vector.broadcast %cst_7 : f32 to vector<8x128xf32>
    %22 = arith.maximumf %20, %21 : vector<8x128xf32>
    %c16_i32 = arith.constant 16 : i32
    %23 = vector.broadcast %c16_i32 : i32 to vector<1x128xi32>
    %24 = arith.cmpi slt, %6, %23 : vector<1x128xi32>
    %25 = vector.shape_cast %24 : vector<1x128xi1> to vector<1x128xi1>
    %26 = vector.broadcast %25 : vector<1x128xi1> to vector<8x128xi1>
    %27 = arith.select %26, %5, %22 : vector<8x128xi1>, vector<8x128xf32>
    %c0_8 = arith.constant 0 : index
    %c0_9 = arith.constant 0 : index
    %28 = vector.load %arg4[%c0_8, %c0_9] : memref<8x128xf32, #tpu.memory_space<vmem>>, vector<8x128xf32>
    tpu.vector_store %arg4[%c0_8, %c0_9], %27 {strides = array<i32>} : memref<8x128xf32, #tpu.memory_space<vmem>>, vector<8x128xf32>,
    return
  }
  func.func @transform_0(%arg0: i32) -> (i32, i32) {
    %c0_i32 = arith.constant 0 : i32
    %c0_i32_0 = arith.constant 0 : i32
    return %arg0, %c0_i32 : i32, i32
  }
  func.func @transform_1(%arg0: i32) -> (i32, i32) {
    %c0_i32 = arith.constant 0 : i32
    %c0_i32_0 = arith.constant 0 : i32
    %c0_i32_1 = arith.constant 0 : i32
    return %c0_i32, %c0_i32_0 : i32, i32
  }
  func.func @transform_2(%arg0: i32) -> (i32, i32) {
    %c0_i32 = arith.constant 0 : i32
    %c0_i32_0 = arith.constant 0 : i32
    %c0_i32_1 = arith.constant 0 : i32
    return %c0_i32, %c0_i32_0 : i32, i32
  }
  func.func @transform_3(%arg0: i32) -> (i32, i32) {
    %c0_i32 = arith.constant 0 : i32
    %c0_i32_0 = arith.constant 0 : i32
    return %arg0, %c0_i32 : i32, i32
  }
}

</mosaic_0001>

<llo_original>
// kernel: tpu_custom_call.1
$region0: #{tpu_custom_call.1}
  #allocation0 [shape = 'u32[]', space=smem, size = 0x4, offset = 0x4, fixed_abs, tag = 'smem constant byte address 0x4 - core index']
  #allocation1 [shape = 'u32[144,128]{1,0:T(1,128)}', space=vmem, size = 0x12000, scoped, tag = 'internal scratch']
  %s0 = inlined_call_operand.hbm [shape: f32[16,32], index: 0, kind: input, shape index: {}]
  %s1 = inlined_call_operand.hbm [shape: f32[32,128], index: 1, kind: input, shape index: {}]
  %s2 = inlined_call_operand.vmem [shape: f32[1,128], index: 2, kind: input, shape index: {}]
  %s3 = inlined_call_operand.hbm [shape: f32[16,128], index: 3, kind: output, shape index: {}]
  %s4 = sld [smem:[#allocation0]]
  $region53: #{tpu_custom_call.1} parent=0
    _
  %s6 = ssub.s32 1, %s4
  %s7 = scalar_select 0, %s6, %s4
  $region1: #{tpu_custom_call.1} parent=0
    #allocation2 [shape = 'u8[8192]{0}', space=vmem, size = 0x2000, scoped, tag = 'input window, operand 0']
    #allocation3 [shape = 's32[2]{0}', space=sflag, size = 0x8, scoped, tag = 'scoped memory for tpu_custom_call.1']
    #allocation4 [shape = 's32[2]{0}', space=sflag, size = 0x8, scoped, tag = 'scoped memory for tpu_custom_call.1']
    #allocation5 [shape = 'u8[16384]{0}', space=vmem, size = 0x4000, scoped, tag = 'input window, operand 1, single buffered']
    #allocation6 [shape = 's32[1]{0}', space=sflag, size = 0x4, scoped, tag = 'scoped memory for tpu_custom_call.1']
    #allocation7 [shape = 'u8[8192]{0}', space=vmem, size = 0x2000, scoped, tag = 'output window, operand 0']
    %8 = vsyncpa [#allocation3], 0
    %s9 = scalar_lea.sflag [#allocation3], 1
    %10 = vsyncpa %s9, 0
    %11 = vsyncpa [#allocation6], 0
    %12 = vsyncpa [#allocation4], 0
    %s13 = scalar_lea.sflag [#allocation4], 1
    %14 = vsyncpa %s13, 0
    loop: start=0, step=1, limit=4
    $region2: #{tpu_custom_call.1} parent=1 // loop_pre_header
      _
    $region3: #{tpu_custom_call.1} parent=1 // loop_header
      %s16 = sphi 0, %s20
      %p17 = scmp.ge.s32.totalorder %s16, 4
      %s26 = sphi 0, %s28
      %s29 = sphi 0, %s26
      %s30 = sphi 0, %s29
      %s46 = sphi 0, %s30
      %s50 = sphi 0, %s50
      %s52 = sphi 0, %s50
      %s53 = sphi 0, %s52
      %s67 = sphi 0, %s53
      %s71 = sphi 0, %s71
      %s73 = sphi 0, %s71
      %s74 = sphi 0, %s73
      %s88 = sphi 0, %s74
      %s94 = sphi 0, %s96
      %s97 = sphi 0, %s94
      %s98 = sphi 0, %s97
      %s114 = sphi 0, %s98
    $region4: #{tpu_custom_call.1} parent=1 // loop_header_branch
      %19 = sbr.rel (%p17) target = $region8
    $region5: #{tpu_custom_call.1} parent=1 // loop_body
      %s21 = ssub.s32 %s16, 1
      %s22 = ssub.s32 %s16, 2
      %s23 = sadd.s32 %s16, 1
      %s24 = ssub.s32 %s16, %s23
      %p25 = scmp.eq.s32.totalorder %s24, 0
      %s27 = sadd.s32 %s26, 1
      %s28 = scalar_select %p25, %s26, %s27
      %p31 = pneg %p25
      %p32 = scmp.eq.s32.totalorder %s16, 1
      %p33 = por %p31, %p32
      %p34 = scmp.ne.s32.totalorder %s26, %s29
      %p35 = scmp.eq.s32.totalorder %s16, 0
      %p36 = por %p34, %p35
      %p37 = scmp.ne.s32.totalorder %s26, %s29
      %p38 = scmp.eq.s32.totalorder %s21, 1
      %p39 = por %p37, %p38
      %p40 = scmp.ne.s32.totalorder %s29, %s30
      %p41 = scmp.eq.s32.totalorder %s21, 0
      %p42 = por %p40, %p41
      %p43 = scmp.ne.s32.totalorder %s29, %s30
      %p44 = scmp.eq.s32.totalorder %s22, 1
      %p45 = por %p43, %p44
      %p47 = scmp.ne.s32.totalorder %s30, %s46
      %p48 = scmp.eq.s32.totalorder %s22, 0
      %p49 = por %p47, %p48
      %s51 = sadd.s32 %s50, 1
      %p54 = scmp.eq.s32.totalorder %s16, 1
      %p55 = scmp.ne.s32.totalorder %s50, %s52
      %p56 = scmp.eq.s32.totalorder %s16, 0
      %p57 = por %p55, %p56
      %p58 = scmp.ne.s32.totalorder %s50, %s52
      %p59 = scmp.eq.s32.totalorder %s21, 1
      %p60 = por %p58, %p59
      %p61 = scmp.ne.s32.totalorder %s52, %s53
      %p62 = scmp.eq.s32.totalorder %s21, 0
      %p63 = por %p61, %p62
      %p64 = scmp.ne.s32.totalorder %s52, %s53
      %p65 = scmp.eq.s32.totalorder %s22, 1
      %p66 = por %p64, %p65
      %p68 = scmp.ne.s32.totalorder %s53, %s67
      %p69 = scmp.eq.s32.totalorder %s22, 0
      %p70 = por %p68, %p69
      %s72 = sadd.s32 %s71, 1
      %p75 = scmp.eq.s32.totalorder %s16, 1
      %p76 = scmp.ne.s32.totalorder %s71, %s73
      %p77 = scmp.eq.s32.totalorder %s16, 0
      %p78 = por %p76, %p77
      %p79 = scmp.ne.s32.totalorder %s71, %s73
      %p80 = scmp.eq.s32.totalorder %s21, 1
      %p81 = por %p79, %p80
      %p82 = scmp.ne.s32.totalorder %s73, %s74
      %p83 = scmp.eq.s32.totalorder %s21, 0
      %p84 = por %p82, %p83
      %p85 = scmp.ne.s32.totalorder %s73, %s74
      %p86 = scmp.eq.s32.totalorder %s22, 1
      %p87 = por %p85, %p86
      %p89 = scmp.ne.s32.totalorder %s74, %s88
      %p90 = scmp.eq.s32.totalorder %s22, 0
      %p91 = por %p89, %p90
      %s92 = ssub.s32 %s16, %s23
      %p93 = scmp.eq.s32.totalorder %s92, 0
      %s95 = sadd.s32 %s94, 1
      %s96 = scalar_select %p93, %s94, %s95
      %p99 = pneg %p93
      %p100 = scmp.eq.s32.totalorder %s16, 1
      %p101 = por %p99, %p100
      %p102 = scmp.ne.s32.totalorder %s94, %s97
      %p103 = scmp.eq.s32.totalorder %s16, 0
      %p104 = por %p102, %p103
      %p105 = scmp.ne.s32.totalorder %s94, %s97
      %p106 = scmp.eq.s32.totalorder %s21, 1
      %p107 = por %p105, %p106
      %p108 = scmp.ne.s32.totalorder %s97, %s98
      %p109 = scmp.eq.s32.totalorder %s21, 0
      %p110 = por %p108, %p109
      %p111 = scmp.ne.s32.totalorder %s97, %s98
      %p112 = scmp.eq.s32.totalorder %s22, 1
      %p113 = por %p111, %p112
      %p115 = scmp.ne.s32.totalorder %s98, %s114
      %p116 = scmp.eq.s32.totalorder %s22, 0
      %p117 = por %p115, %p116
      %p118 = scmp.le.s32.totalorder 1, %s16
      %p119 = scmp.lt.s32.totalorder %s16, 3
      %p120 = pnand %p118, %p119
      %p121 = pneg %p120
      // Predicated region
      $region9: #{tpu_custom_call.1} parent=5 // pred_check
        _
      $region10: #{tpu_custom_call.1} parent=5 // pred_check_branch
        %123 = sbr.rel (%p120) target = $region12
      $region11: #{tpu_custom_call.1} parent=5 // pred_region
        %s124 = ssub.s32 %s16, 1
        // Predicated region
        $region13: #{tpu_custom_call.1} parent=11 // pred_check
          %p125 = pneg %p63
        $region14: #{tpu_custom_call.1} parent=11 // pred_check_branch
          %127 = sbr.rel (%p125) target = $region16
        $region15: #{tpu_custom_call.1} parent=11 // pred_region
          %s129 = ssub.s32 512, 512
          %130 = vsyncadd [#allocation6], %s129
          %s131 = sshll.u32 [#allocation5], 4
          %s132 = int_to_ptr.vmem [resolvable:$true] %s131
          %137 = dma.hbm_to_vmem [thread:$0]  %s1, 512, %s132, [#allocation6], 128, 128, 8
        $region16: #{tpu_custom_call.1} parent=11 // pred_fallthru
          _
        // Predicated region
        $region17: #{tpu_custom_call.1} parent=11 // pred_check
          %p138 = pneg %p84
        $region18: #{tpu_custom_call.1} parent=11 // pred_check_branch
          %140 = sbr.rel (%p138) target = $region20
        $region19: #{tpu_custom_call.1} parent=11 // pred_region
          _
        $region20: #{tpu_custom_call.1} parent=11 // pred_fallthru
          _
      $region12: #{tpu_custom_call.1} parent=5 // pred_fallthru
        _
      %p141 = scmp.lt.s32.totalorder %s16, 2
      // Predicated region
      $region21: #{tpu_custom_call.1} parent=5 // pred_check
        %p142 = pneg %p141
      $region22: #{tpu_custom_call.1} parent=5 // pred_check_branch
        %144 = sbr.rel (%p142) target = $region24
      $region23: #{tpu_custom_call.1} parent=5 // pred_region
        // Predicated region
        $region25: #{tpu_custom_call.1} parent=23 // pred_check
          %p145 = pneg %p36
        $region26: #{tpu_custom_call.1} parent=23 // pred_check_branch
          %147 = sbr.rel (%p145) target = $region28
        $region27: #{tpu_custom_call.1} parent=23 // pred_region
          %s148 = sand.u32 %s26, 1
          %s149 = scalar_lea.sflag [#allocation3], %s148
          %s150 = sand.u32 %s26, 1
          %s151 = smul.addr %s150, 8
          %s152 = scalar_lea.vmem [#allocation2], %s151
          %s154 = ssub.s32 128, 128
          %155 = vsyncadd %s149, %s154
          %s156 = smul.addr %s16, 128
          %s157 = scalar_lea.hbm %s0, %s156
          %s159 = sshll.u32 %s152, 4
          %s160 = int_to_ptr.vmem [resolvable:$true] %s159
          %162 = dma.hbm_to_vmem [thread:$0]  %s157, 128, %s160, %s149
        $region28: #{tpu_custom_call.1} parent=23 // pred_fallthru
          _
      $region24: #{tpu_custom_call.1} parent=5 // pred_fallthru
        _
      %p163 = scmp.le.s32.totalorder 1, %s16
      %p164 = scmp.lt.s32.totalorder %s16, 3
      %p165 = pnand %p163, %p164
      %p166 = pneg %p165
      // Predicated region
      $region29: #{tpu_custom_call.1} parent=5 // pred_check
        _
      $region30: #{tpu_custom_call.1} parent=5 // pred_check_branch
        %168 = sbr.rel (%p165) target = $region32
      $region31: #{tpu_custom_call.1} parent=5 // pred_region
        %s169 = ssub.s32 %s16, 1
        %s170 = sand.u32 %s29, 1
        %s171 = scalar_lea.sflag [#allocation3], %s170
        %s172 = sand.u32 %s29, 1
        %s173 = smul.addr %s172, 8
        %s174 = scalar_lea.vmem [#allocation2], %s173
        // Predicated region
        $region33: #{tpu_custom_call.1} parent=31 // pred_check
          %p175 = pneg %p42
        $region34: #{tpu_custom_call.1} parent=31 // pred_check_branch
          %177 = sbr.rel (%p175) target = $region36
        $region35: #{tpu_custom_call.1} parent=31 // pred_region
          %178 = dma.done %s171, 128
        $region36: #{tpu_custom_call.1} parent=31 // pred_fallthru
          _
        // Predicated region
        $region37: #{tpu_custom_call.1} parent=31 // pred_check
          %p179 = pneg %p63
        $region38: #{tpu_custom_call.1} parent=31 // pred_check_branch
          %181 = sbr.rel (%p179) target = $region40
        $region39: #{tpu_custom_call.1} parent=31 // pred_region
          %182 = dma.done [#allocation6], 512
        $region40: #{tpu_custom_call.1} parent=31 // pred_fallthru
          _
        %s183 = sand.u32 %s29, 1
        %s184 = scalar_lea.sflag [#allocation3], %s183
        %s185 = sand.u32 %s29, 1
        %s186 = smul.addr %s185, 8
        %s187 = scalar_lea.vmem [#allocation2], %s186
        %p188 = pneg %p42
        %p189 = pneg %p39
        %p190 = pneg %p63
        %p191 = pneg %p60
        %p192 = pneg %p84
        %p193 = pneg %p81
        %p194 = pneg %p110
        %p195 = pneg %p107
        %s196 = sand.u32 %s97, 1
        %s197 = scalar_lea.sflag [#allocation4], %s196
        %s198 = sand.u32 %s97, 1
        %s199 = smul.addr %s198, 8
        %s200 = scalar_lea.vmem [#allocation7], %s199
        %v201 = vld [vmem:[%s174] sm:$0xff]
        %v202 = vld [vmem:[#allocation5] sm:$0xff]
        %v203 = vld [vmem:[#allocation5 + $0x8] sm:$0xff]
        %v204 = vld [vmem:[#allocation5 + $0x10] sm:$0xff]
        %v205 = vld [vmem:[#allocation5 + $0x18] sm:$0xff]
        %v206 = vld [vmem:[%s2] sm:$0x1]
        %v208 = vlaneseq
        %v209 = vshrl.u32 %v208, 7
        %v210 = vsub.s32 0, %v209
        %v211 = vrot.slane %v206, %v210
        %vm213 = vcmask 261120
        %v215 = vsel %vm213, %v201, 0
        %217 = vmatprep.subr.mxu0 0.0
        %218 = vmatpush1.msra.mxu0 %v202
        %219 = vmatprep.subr.mxu0 0.0
        %220 = vmatpush1.msra.mxu0 %v203
        %221 = vmatprep.subr.mxu0 0.0
        %222 = vmatpush1.msra.mxu0 %v204
        %223 = vmatprep.subr.mxu0 0.0
        %224 = vmatpush1.msra.mxu0 %v205
        %225 = vmatprep.subr.mxu0 0.0
        %226 = vmatpush1.msra.mxu0 0.0
        %227 = vmatprep.subr.mxu0 0.0
        %228 = vmatpush1.msra.mxu0 0.0
        %229 = vmatprep.subr.mxu0 0.0
        %230 = vmatpush1.msra.mxu0 0.0
        %231 = vmatprep.subr.mxu0 0.0
        %232 = vmatpush1.msra.mxu0 0.0
        %233 = vmatprep.subr.mxu0 0.0
        %234 = vmatpush1.msra.mxu0 0.0
        %235 = vmatprep.subr.mxu0 0.0
        %236 = vmatpush1.msra.mxu0 0.0
        %237 = vmatprep.subr.mxu0 0.0
        %238 = vmatpush1.msra.mxu0 0.0
        %239 = vmatprep.subr.mxu0 0.0
        %240 = vmatpush1.msra.mxu0 0.0
        %241 = vmatprep.subr.mxu0 0.0
        %242 = vmatpush1.msra.mxu0 0.0
        %243 = vmatprep.subr.mxu0 0.0
        %244 = vmatpush1.msra.mxu0 0.0
        %245 = vmatprep.subr.mxu0 0.0
        %246 = vmatpush1.msra.mxu0 0.0
        %247 = vmatprep.subr.mxu0 0.0
        %248 = vmatpush1.msra.mxu0 0.0
        %249 = vmatprep.subr.mxu0 0.0
        %250 = vmatpush1.msra.mxu0 0.0
        %251 = vmatprep.subr.mxu0 0.0
        %252 = vmatpush1.msra.mxu0 0.0
        %253 = vmatprep.subr.mxu0 0.0
        %254 = vmatpush1.msra.mxu0 0.0
        %255 = vmatprep.subr.mxu0 0.0
        %256 = vmatpush1.msra.mxu0 0.0
        %257 = vmatprep.subr.mxu0 0.0
        %258 = vmatpush1.msra.mxu0 0.0
        %259 = vmatprep.subr.mxu0 0.0
        %260 = vmatpush1.msra.mxu0 0.0
        %261 = vmatprep.subr.mxu0 0.0
        %262 = vmatpush1.msra.mxu0 0.0
        %263 = vmatprep.subr.mxu0 0.0
        %264 = vmatpush1.msra.mxu0 0.0
        %265 = vmatprep.subr.mxu0 0.0
        %266 = vmatpush1.msra.mxu0 0.0
        %267 = vmatprep.subr.mxu0 0.0
        %268 = vmatpush1.msra.mxu0 0.0
        %269 = vmatprep.subr.mxu0 0.0
        %270 = vmatpush1.msra.mxu0 0.0
        %271 = vmatprep.subr.mxu0 0.0
        %272 = vmatpush1.msra.mxu0 0.0
        %273 = vmatprep.subr.mxu0 0.0
        %274 = vmatpush1.msra.mxu0 0.0
        %275 = vmatprep.subr.mxu0 0.0
        %276 = vmatpush1.msra.mxu0 0.0
        %277 = vmatprep.subr.mxu0 0.0
        %278 = vmatpush1.msra.mxu0 0.0
        %279 = vmatprep.subr.mxu0 0.0
        %280 = vmatpush1.msra.mxu0 0.0
        %281 = vmatprep.mubr.f32.mxu0 0.0
        %282 = vmatmul.mubr.f32.gmra.mrb[0].mxu0 %v215
        %v283 = vpop.f32.mrb[0].mxu0
        %v284 = vadd.f32 %v211, %v283
        %v285 = vpop.f32.mrb[0].mxu0
        %286 = vdwg.mxu0
        %v287 = vlaneseq
        %v288 = vand.u32 %v287, 127
        %v289 = vmax.f32 %v284, 0.0
        %vm290 = vcmp.ne.f32.partialorder %v284, %v284
        %v291 = vadd.f32 %v284, 0.0
        %v292 = vand.u32 2147483647, %v284
        %v293 = vsub.f32 0.0, %v292
        %v294 = vmul.f32 %v293, 1.442695
        %v295 = vpow.pop %v294
        %v296 = vadd.f32 %v295, 1.0
        %v297 = vlog2.pop %v296
        %v298 = vmul.f32 %v297, 0.6931472
        %v299 = vmul.f32 -0.5, %v295
        %v300 = vadd.f32 %v299, 1.0
        %v301 = vmul.f32 %v300, %v295
        %v302 = vand.u32 2147483647, %v295
        %vm303 = vcmp.lt.f32.partialorder %v302, 0.0004427343
        %v304 = vsel %vm303, %v301, %v298
        %v305 = vadd.f32 %v289, %v304
        %v306 = vsel %vm290, %v291, %v305
        %v307 = vmax.f32 %v306, 0.0
        %vm308 = vcmp.lt.s32.totalorder %v288, 16
        %v309 = vsel %vm308, 1, 0
        %vm310 = vcmp.eq.s32.totalorder %v309, 1
        %v311 = vsel %vm310, %v284, %v307
        %312 = vst [vmem:[%s200] sm:$0xff] %v311
        %s313 = sand.u32 %s97, 1
        %s314 = scalar_lea.sflag [#allocation4], %s313
        %s315 = sand.u32 %s97, 1
        %s316 = smul.addr %s315, 8
        %s317 = scalar_lea.vmem [#allocation7], %s316
        // Predicated region
        $region41: #{tpu_custom_call.1} parent=31 // pred_check
          %p318 = pneg %p107
        $region42: #{tpu_custom_call.1} parent=31 // pred_check_branch
          %320 = sbr.rel (%p318) target = $region44
        $region43: #{tpu_custom_call.1} parent=31 // pred_region
          %s322 = ssub.s32 128, 128
          %323 = vsyncadd %s314, %s322
          %s324 = smul.addr %s21, 128
          %s325 = scalar_lea.hbm %s3, %s324
          %s327 = sshll.u32 %s317, 4
          %s328 = int_to_ptr.vmem [resolvable:$true] %s327
          %330 = dma.vmem_to_hbm [thread:$0]  %s328, 128, %s325, %s314
        $region44: #{tpu_custom_call.1} parent=31 // pred_fallthru
          _
      $region32: #{tpu_custom_call.1} parent=5 // pred_fallthru
        _
      %p331 = scmp.le.s32.totalorder 2, %s16
      // Predicated region
      $region45: #{tpu_custom_call.1} parent=5 // pred_check
        %p332 = pneg %p331
      $region46: #{tpu_custom_call.1} parent=5 // pred_check_branch
        %334 = sbr.rel (%p332) target = $region48
      $region47: #{tpu_custom_call.1} parent=5 // pred_region
        %s335 = ssub.s32 %s16, 2
        // Predicated region
        $region49: #{tpu_custom_call.1} parent=47 // pred_check
          %p336 = pneg %p113
        $region50: #{tpu_custom_call.1} parent=47 // pred_check_branch
          %338 = sbr.rel (%p336) target = $region52
        $region51: #{tpu_custom_call.1} parent=47 // pred_region
          %s339 = sand.u32 %s98, 1
          %s340 = scalar_lea.sflag [#allocation4], %s339
          %s341 = sand.u32 %s98, 1
          %s342 = smul.addr %s341, 8
          %s343 = scalar_lea.vmem [#allocation7], %s342
          %344 = dma.done %s340, 128
        $region52: #{tpu_custom_call.1} parent=47 // pred_fallthru
          _
      $region48: #{tpu_custom_call.1} parent=5 // pred_fallthru
        _
    $region6: #{tpu_custom_call.1} parent=1 // loop_footer
      %s20 = sadd.s32 1, %s16
    $region7: #{tpu_custom_call.1} parent=1 // loop_footer_branch
      %15 = sbr.rel target = $region3
    $region8: #{tpu_custom_call.1} parent=1 // loop_exit
      _
    %345 = vsyncpa [#allocation3], 1
    %s346 = scalar_lea.sflag [#allocation3], 1
    %347 = vsyncpa %s346, 1
    %348 = vsyncpa [#allocation6], 1
    %349 = vsyncpa [#allocation4], 1
    %s350 = scalar_lea.sflag [#allocation4], 1
    %351 = vsyncpa %s350, 1

</llo_original>
